<compile_context>
chip_gen: v6e
topology: v6e:2x2x1
jax: 0.10.0
libtpu: 0.0.40
codegen_flags: <defaults>
</compile_context>

<pallas_src>
import jax
import jax.numpy as jnp
from jax import lax
from jax.experimental import pallas as pl
from jax.experimental.pallas import tpu as pltpu


def _net_kernel(x_ref, w_ref, o_ref):
    # x_ref: (TB, 300) f32 in VMEM   (current batch tile)
    # w_ref: (4, 300)  f32 in VMEM   (resident across all grid steps)
    # o_ref: (TB, 4)   f32 in VMEM
    x = x_ref[...]
    w = w_ref[...]

    # Linear (no bias): logits[b, o] = sum_k x[b, k] * w[o, k]
    # Contract last dim of both operands -> (TB, 4); weight consumed in its
    # native (out, in) layout, accumulation in f32 on the MXU.
    logits = lax.dot_general(
        x, w,
        dimension_numbers=(((1,), (1,)), ((), ())),
        preferred_element_type=jnp.float32,
    )

    # Numerically-stable softmax over the feature axis (dim=1).
    # Exact divide: the epilogue is tiny ((TB, 4)), so accuracy > approx-recip.
    m = jnp.max(logits, axis=-1, keepdims=True)
    e = jnp.exp(logits - m)
    s = jnp.sum(e, axis=-1, keepdims=True)
    o_ref[...] = (e / s).astype(o_ref.dtype)


def net_forward(x, w, *, tb=1024):
    """x: (B, 300) f32, w: (4, 300) f32 -> (B, 4) f32 softmax probabilities."""
    B, in_f = x.shape
    out_f, in_f_w = w.shape
    assert in_f == in_f_w

    # Tile size for the batch axis. If the whole batch fits in one tile, use it
    # (block == full dim is always legal); otherwise TB=tb (multiple of 8, so it
    # satisfies the f32 sublane rule and the last partial tile is masked by
    # Pallas on writeback).
    tb = B if B <= tb else tb
    grid = (pl.cdiv(B, tb),)

    return pl.pallas_call(
        _net_kernel,
        out_shape=jax.ShapeDtypeStruct((B, out_f), jnp.float32),
        grid=grid,
        in_specs=[
            # x: one (TB, 300) tile per grid step -> pipelined HBM->VMEM DMA.
            pl.BlockSpec((tb, in_f), lambda i: (i, 0)),
            # weight: same tiny block every step -> stays resident in VMEM.
            pl.BlockSpec((out_f, in_f), lambda i: (0, 0)),
        ],
        out_specs=pl.BlockSpec((tb, out_f), lambda i: (i, 0)),
        compiler_params=pltpu.CompilerParams(
            # Batch grid steps are independent -> shard across TCs on v7x.
            dimension_semantics=("parallel",),
        ),
    )(x, w)


if __name__ == "__main__":
    key = jax.random.PRNGKey(0)
    k_x, k_w = jax.random.split(key)

    B, IN_F, OUT_F = 8, 300, 4

    # Deterministic input + weight init (mimic PyTorch Linear's
    # U(-1/sqrt(in_features), 1/sqrt(in_features)) bound).
    x = jax.random.normal(k_x, (B, IN_F), dtype=jnp.float32)
    bound = 1.0 / jnp.sqrt(jnp.float32(IN_F))
    w = jax.random.uniform(
        k_w, (OUT_F, IN_F), dtype=jnp.float32, minval=-bound, maxval=bound
    )

    # Main run (single tile: B <= tb).
    out = net_forward(x, w)
    out = jax.block_until_ready(out)

    ref = jax.nn.softmax(x @ w.T, axis=1)
    assert out.shape == (B, OUT_F)
    assert jnp.allclose(out, ref, atol=1e-5, rtol=1e-5)

    # Extra sanity check exercising the batch-tiled grid path (grid=(3,)).
    B2 = 24
    x2 = jax.random.normal(jax.random.PRNGKey(1), (B2, IN_F), dtype=jnp.float32)
    out2 = jax.block_until_ready(net_forward(x2, w, tb=8))
    ref2 = jax.nn.softmax(x2 @ w.T, axis=1)
    assert jnp.allclose(out2, ref2, atol=1e-5, rtol=1e-5)

    print("KERNEL_OK")
</pallas_src>

<mosaic_0001>
module attributes {stable_mosaic.version = 11 : i64} {
  func.func @_net_kernel(%arg0: i32, %arg1: memref<8x300xf32, #tpu.memory_space<vmem>>, %arg2: memref<4x300xf32, #tpu.memory_space<vmem>>, %arg3: memref<8x4xf32, #tpu.memory_space<vmem>>) attributes {dimension_semantics = [#tpu.dimension_semantics<parallel>], iteration_bounds = array<i64: 1>, scalar_prefetch = 0 : i64, scratch_operands = 0 : i64, tpu.core_type = #tpu.core_type<tc>, window_params = [{transform_indices = @transform_0, window_bounds = array<i64: 8, 300>}, {pipeline_mode = #tpu.pipeline_mode<synchronous>, transform_indices = @transform_1, window_bounds = array<i64: 4, 300>}, {transform_indices = @transform_2, window_bounds = array<i64: 8, 4>}]} {
    %c0 = arith.constant 0 : index
    %c0_0 = arith.constant 0 : index
    %0 = vector.load %arg1[%c0, %c0_0] : memref<8x300xf32, #tpu.memory_space<vmem>>, vector<8x300xf32>
    %c0_1 = arith.constant 0 : index
    %c0_2 = arith.constant 0 : index
    %1 = vector.load %arg2[%c0_1, %c0_2] : memref<4x300xf32, #tpu.memory_space<vmem>>, vector<4x300xf32>
    %cst = arith.constant dense<0.000000e+00> : vector<8x4xf32>
    %2 = tpu.matmul %0, %1, %cst {dimension_numbers = #tpu.dot_dimension_numbers<[1], [1], [0], [0], [0, 0, 1, 0], [], []>} : vector<8x300xf32>, vector<4x300xf32>, vector<8x4xf32> -> vector<8x4xf32>
    %cst_3 = arith.constant dense<0xFF800000> : vector<8xf32>
    %3 = vector.multi_reduction <maximumf>, %2, %cst_3 [1] : vector<8x4xf32> to vector<8xf32>
    %4 = vector.shape_cast %3 : vector<8xf32> to vector<8x1xf32>
    %5 = vector.broadcast %4 : vector<8x1xf32> to vector<8x4xf32>
    %6 = arith.subf %2, %5 : vector<8x4xf32>
    %7 = math.exp %6 : vector<8x4xf32>
    %cst_4 = arith.constant dense<0.000000e+00> : vector<8xf32>
    %8 = vector.multi_reduction <add>, %7, %cst_4 [1] : vector<8x4xf32> to vector<8xf32>
    %9 = vector.shape_cast %8 : vector<8xf32> to vector<8x1xf32>
    %10 = vector.broadcast %9 : vector<8x1xf32> to vector<8x4xf32>
    %11 = arith.divf %7, %10 : vector<8x4xf32>
    %c0_5 = arith.constant 0 : index
    %c0_6 = arith.constant 0 : index
    %12 = vector.load %arg3[%c0_5, %c0_6] : memref<8x4xf32, #tpu.memory_space<vmem>>, vector<8x4xf32>
    tpu.vector_store %arg3[%c0_5, %c0_6], %11 {strides = array<i32>} : memref<8x4xf32, #tpu.memory_space<vmem>>, vector<8x4xf32>,
    return
  }
  func.func @transform_0(%arg0: i32) -> (i32, i32) {
    %c0_i32 = arith.constant 0 : i32
    %c0_i32_0 = arith.constant 0 : i32
    return %arg0, %c0_i32 : i32, i32
  }
  func.func @transform_1(%arg0: i32) -> (i32, i32) {
    %c0_i32 = arith.constant 0 : i32
    %c0_i32_0 = arith.constant 0 : i32
    %c0_i32_1 = arith.constant 0 : i32
    return %c0_i32, %c0_i32_0 : i32, i32
  }
  func.func @transform_2(%arg0: i32) -> (i32, i32) {
    %c0_i32 = arith.constant 0 : i32
    %c0_i32_0 = arith.constant 0 : i32
    return %arg0, %c0_i32 : i32, i32
  }
}

</mosaic_0001>

<llo_original>
// kernel: tpu_custom_call.1
$region0: #{tpu_custom_call.1}
  #allocation0 [shape = 'u32[]', space=smem, size = 0x4, offset = 0x4, fixed_abs, tag = 'smem constant byte address 0x4 - core index']
  #allocation1 [shape = 'u32[144,128]{1,0:T(1,128)}', space=vmem, size = 0x12000, scoped, tag = 'internal scratch']
  %s0 = inlined_call_operand.hbm [shape: f32[8,300], index: 0, kind: input, shape index: {}]
  %s1 = inlined_call_operand.hbm [shape: f32[4,300], index: 1, kind: input, shape index: {}]
  %s2 = inlined_call_operand.vmem [shape: f32[8,4], index: 2, kind: output, shape index: {}]
  %s3 = sld [smem:[#allocation0]]
  $region26: #{tpu_custom_call.1} parent=0
    _
  %s5 = ssub.s32 1, %s3
  %s6 = scalar_select 0, %s5, %s3
  $region1: #{tpu_custom_call.1} parent=0
    #allocation2 [shape = 'u8[12288]{0}', space=vmem, size = 0x3000, scoped, tag = 'input window, operand 0, single buffered']
    #allocation3 [shape = 's32[1]{0}', space=sflag, size = 0x4, scoped, tag = 'scoped memory for tpu_custom_call.1']
    #allocation4 [shape = 'u8[6144]{0}', space=vmem, size = 0x1800, scoped, tag = 'input window, operand 1, single buffered']
    #allocation5 [shape = 's32[1]{0}', space=sflag, size = 0x4, scoped, tag = 'scoped memory for tpu_custom_call.1']
    %7 = vsyncpa [#allocation3], 0
    %8 = vsyncpa [#allocation5], 0
    // Predicated region
    $region2: #{tpu_custom_call.1} parent=1 // pred_check
      _
    $region3: #{tpu_custom_call.1} parent=1 // pred_check_branch
      %10 = sbr.rel (0) target = $region5
    $region4: #{tpu_custom_call.1} parent=1 // pred_region
      %s12 = ssub.s32 384, 384
      %13 = vsyncadd [#allocation3], %s12
      %s15 = sshll.u32 [#allocation2], 4
      %s16 = int_to_ptr.vmem [resolvable:$true] %s15
      %18 = dma.hbm_to_vmem [thread:$0]  %s0, 384, %s16, [#allocation3]
    $region5: #{tpu_custom_call.1} parent=1 // pred_fallthru
      _
    // Predicated region
    $region6: #{tpu_custom_call.1} parent=1 // pred_check
      _
    $region7: #{tpu_custom_call.1} parent=1 // pred_check_branch
      %20 = sbr.rel (0) target = $region9
    $region8: #{tpu_custom_call.1} parent=1 // pred_region
      %s22 = ssub.s32 192, 192
      %23 = vsyncadd [#allocation5], %s22
      %s25 = sshll.u32 [#allocation4], 4
      %s26 = int_to_ptr.vmem [resolvable:$true] %s25
      %28 = dma.hbm_to_vmem [thread:$0]  %s1, 192, %s26, [#allocation5]
    $region9: #{tpu_custom_call.1} parent=1 // pred_fallthru
      _
    // Predicated region
    $region10: #{tpu_custom_call.1} parent=1 // pred_check
      _
    $region11: #{tpu_custom_call.1} parent=1 // pred_check_branch
      %30 = sbr.rel (0) target = $region13
    $region12: #{tpu_custom_call.1} parent=1 // pred_region
      %31 = dma.done [#allocation3], 384
    $region13: #{tpu_custom_call.1} parent=1 // pred_fallthru
      _
    // Predicated region
    $region14: #{tpu_custom_call.1} parent=1 // pred_check
      _
    $region15: #{tpu_custom_call.1} parent=1 // pred_check_branch
      %33 = sbr.rel (0) target = $region17
    $region16: #{tpu_custom_call.1} parent=1 // pred_region
      %34 = dma.done [#allocation5], 192
    $region17: #{tpu_custom_call.1} parent=1 // pred_fallthru
      _
    %v35 = vld [vmem:[#allocation2] sm:$0xff]
    %v36 = vld [vmem:[#allocation2 + $0x8] sm:$0xff]
    %v37 = vld [vmem:[#allocation2 + $0x10] sm:$0xff]
    %v38 = vld [vmem:[#allocation4] sm:$0xff]
    %v39 = vld [vmem:[#allocation4 + $0x8] sm:$0xf]
    %v42 = vcombine.high %v38, %v38
    %vm44 = vcmask 359424
    %v46 = vsel %vm44, %v37, 0
    %v48 = vsel %vm44, %v39, 0
    %50 = vmatprep.subr.mxu0 0.0
    %51 = vmatpush1.xpose.msra.mxu0 0.0
    %52 = vmatprep.subr.mxu0 0.0
    %53 = vmatpush1.xpose.msra.mxu0 0.0
    %54 = vmatprep.subr.mxu0 0.0
    %55 = vmatpush1.xpose.msra.mxu0 0.0
    %56 = vmatprep.subr.mxu0 0.0
    %57 = vmatpush1.xpose.msra.mxu0 0.0
    %58 = vmatprep.subr.mxu0 0.0
    %59 = vmatpush1.xpose.msra.mxu0 0.0
    %60 = vmatprep.subr.mxu0 0.0
    %61 = vmatpush1.xpose.msra.mxu0 0.0
    %62 = vmatprep.subr.mxu0 0.0
    %63 = vmatpush1.xpose.msra.mxu0 0.0
    %64 = vmatprep.subr.mxu0 0.0
    %65 = vmatpush1.xpose.msra.mxu0 0.0
    %66 = vmatprep.subr.mxu0 0.0
    %67 = vmatpush1.xpose.msra.mxu0 0.0
    %68 = vmatprep.subr.mxu0 0.0
    %69 = vmatpush1.xpose.msra.mxu0 0.0
    %70 = vmatprep.subr.mxu0 0.0
    %71 = vmatpush1.xpose.msra.mxu0 0.0
    %72 = vmatprep.subr.mxu0 0.0
    %73 = vmatpush1.xpose.msra.mxu0 0.0
    %74 = vmatprep.subr.mxu0 0.0
    %75 = vmatpush1.xpose.msra.mxu0 0.0
    %76 = vmatprep.subr.mxu0 0.0
    %77 = vmatpush1.xpose.msra.mxu0 0.0
    %78 = vmatprep.subr.mxu0 0.0
    %79 = vmatpush1.xpose.msra.mxu0 0.0
    %80 = vmatprep.subr.mxu0 %v42
    %81 = vmatpush1.xpose.msra.mxu0 %v38
    %82 = vmatprep.subr.mxu0 0.0
    %83 = vmatpush2.xpose.msra.mxu0 0.0
    %84 = vmatprep.subr.mxu0 0.0
    %85 = vmatpush2.xpose.msra.mxu0 0.0
    %86 = vmatprep.subr.mxu0 0.0
    %87 = vmatpush2.xpose.msra.mxu0 0.0
    %88 = vmatprep.subr.mxu0 0.0
    %89 = vmatpush2.xpose.msra.mxu0 0.0
    %90 = vmatprep.subr.mxu0 0.0
    %91 = vmatpush2.xpose.msra.mxu0 0.0
    %92 = vmatprep.subr.mxu0 0.0
    %93 = vmatpush2.xpose.msra.mxu0 0.0
    %94 = vmatprep.subr.mxu0 0.0
    %95 = vmatpush2.xpose.msra.mxu0 0.0
    %96 = vmatprep.subr.mxu0 0.0
    %97 = vmatpush2.xpose.msra.mxu0 0.0
    %98 = vmatprep.subr.mxu0 0.0
    %99 = vmatpush2.xpose.msra.mxu0 0.0
    %100 = vmatprep.subr.mxu0 0.0
    %101 = vmatpush2.xpose.msra.mxu0 0.0
    %102 = vmatprep.subr.mxu0 0.0
    %103 = vmatpush2.xpose.msra.mxu0 0.0
    %104 = vmatprep.subr.mxu0 0.0
    %105 = vmatpush2.xpose.msra.mxu0 0.0
    %106 = vmatprep.subr.mxu0 0.0
    %107 = vmatpush2.xpose.msra.mxu0 0.0
    %108 = vmatprep.subr.mxu0 0.0
    %109 = vmatpush2.xpose.msra.mxu0 0.0
    %110 = vmatprep.subr.mxu0 0.0
    %111 = vmatpush2.xpose.msra.mxu0 0.0
    %112 = vmatprep.subr.mxu0 0.0
    %113 = vmatpush2.xpose.msra.mxu0 0.0
    %114 = vmatprep.mubr.f32.mxu0 %v36
    %115 = vmatmul.mubr.f32.gmra.mxu0 %v35
    %v116 = vpop.f32.mrf.mxu0
    %v117 = vadd.f32 0.0, %v116
    %v118 = vpop.f32.mrf.mxu0
    %119 = vdwg.mxu0
    %120 = vmatprep.subr.mxu0 0.0
    %121 = vmatpush1.xpose.msra.mxu0 0.0
    %122 = vmatprep.subr.mxu0 0.0
    %123 = vmatpush1.xpose.msra.mxu0 0.0
    %124 = vmatprep.subr.mxu0 0.0
    %125 = vmatpush1.xpose.msra.mxu0 0.0
    %126 = vmatprep.subr.mxu0 0.0
    %127 = vmatpush1.xpose.msra.mxu0 0.0
    %128 = vmatprep.subr.mxu0 0.0
    %129 = vmatpush1.xpose.msra.mxu0 0.0
    %130 = vmatprep.subr.mxu0 0.0
    %131 = vmatpush1.xpose.msra.mxu0 0.0
    %132 = vmatprep.subr.mxu0 0.0
    %133 = vmatpush1.xpose.msra.mxu0 0.0
    %134 = vmatprep.subr.mxu0 0.0
    %135 = vmatpush1.xpose.msra.mxu0 0.0
    %136 = vmatprep.subr.mxu0 0.0
    %137 = vmatpush1.xpose.msra.mxu0 0.0
    %138 = vmatprep.subr.mxu0 0.0
    %139 = vmatpush1.xpose.msra.mxu0 0.0
    %140 = vmatprep.subr.mxu0 0.0
    %141 = vmatpush1.xpose.msra.mxu0 0.0
    %142 = vmatprep.subr.mxu0 0.0
    %143 = vmatpush1.xpose.msra.mxu0 0.0
    %144 = vmatprep.subr.mxu0 0.0
    %145 = vmatpush1.xpose.msra.mxu0 0.0
    %146 = vmatprep.subr.mxu0 0.0
    %147 = vmatpush1.xpose.msra.mxu0 0.0
    %148 = vmatprep.subr.mxu0 0.0
    %149 = vmatpush1.xpose.msra.mxu0 0.0
    %150 = vmatprep.subr.mxu0 0.0
    %151 = vmatpush1.xpose.msra.mxu0 %v48
    %152 = vmatprep.subr.mxu0 0.0
    %153 = vmatpush2.xpose.msra.mxu0 0.0
    %154 = vmatprep.subr.mxu0 0.0
    %155 = vmatpush2.xpose.msra.mxu0 0.0
    %156 = vmatprep.subr.mxu0 0.0
    %157 = vmatpush2.xpose.msra.mxu0 0.0
    %158 = vmatprep.subr.mxu0 0.0
    %159 = vmatpush2.xpose.msra.mxu0 0.0
    %160 = vmatprep.subr.mxu0 0.0
    %161 = vmatpush2.xpose.msra.mxu0 0.0
    %162 = vmatprep.subr.mxu0 0.0
    %163 = vmatpush2.xpose.msra.mxu0 0.0
    %164 = vmatprep.subr.mxu0 0.0
    %165 = vmatpush2.xpose.msra.mxu0 0.0
    %166 = vmatprep.subr.mxu0 0.0
    %167 = vmatpush2.xpose.msra.mxu0 0.0
    %168 = vmatprep.subr.mxu0 0.0
    %169 = vmatpush2.xpose.msra.mxu0 0.0
    %170 = vmatprep.subr.mxu0 0.0
    %171 = vmatpush2.xpose.msra.mxu0 0.0
    %172 = vmatprep.subr.mxu0 0.0
    %173 = vmatpush2.xpose.msra.mxu0 0.0
    %174 = vmatprep.subr.mxu0 0.0
    %175 = vmatpush2.xpose.msra.mxu0 0.0
    %176 = vmatprep.subr.mxu0 0.0
    %177 = vmatpush2.xpose.msra.mxu0 0.0
    %178 = vmatprep.subr.mxu0 0.0
    %179 = vmatpush2.xpose.msra.mxu0 0.0
    %180 = vmatprep.subr.mxu0 0.0
    %181 = vmatpush2.xpose.msra.mxu0 0.0
    %182 = vmatprep.subr.mxu0 0.0
    %183 = vmatpush2.xpose.msra.mxu0 0.0
    %184 = vmatprep.mubr.f32.mxu0 0.0
    %185 = vmatmul.mubr.f32.gmra.mxu0 %v46
    %v186 = vpop.f32.mrf.mxu0
    %v187 = vadd.f32 %v117, %v186
    %v188 = vpop.f32.mrf.mxu0
    %189 = vdwg.mxu0
    %vm190 = vcmask 31744
    %v191 = vsel %vm190, %v187, -inf
    %192 = vmax.xlane.f32.xlu0 %v191
    %v193 = vpop.xlane.xlu0 %192
    %v194 = vsub.f32 %v187, %v193
    %v195 = vmul.f32 %v194, 1.442695
    %v196 = vpow.pop %v195
    %v197 = vsel %vm190, %v196, 0.0
    %198 = vadd.xlane.f32.xlu0 %v197
    %v199 = vpop.xlane.xlu0 %198
    %v200 = vrcp.pop %v199
    %v201 = vmul.f32 %v196, %v200
    %202 = vst.msk [vmem:[%s2] sm:$0xff] %vm190, %v201
    // Predicated region
    $region18: #{tpu_custom_call.1} parent=1 // pred_check
      _
    $region19: #{tpu_custom_call.1} parent=1 // pred_check_branch
      %204 = sbr.rel (0) target = $region21
    $region20: #{tpu_custom_call.1} parent=1 // pred_region
      _
    $region21: #{tpu_custom_call.1} parent=1 // pred_fallthru
      _
    // Predicated region
    $region22: #{tpu_custom_call.1} parent=1 // pred_check
      _
    $region23: #{tpu_custom_call.1} parent=1 // pred_check_branch
      %206 = sbr.rel (0) target = $region25
    $region24: #{tpu_custom_call.1} parent=1 // pred_region
      _
    $region25: #{tpu_custom_call.1} parent=1 // pred_fallthru
      _
    %207 = vsyncpa [#allocation3], 1
    %208 = vsyncpa [#allocation5], 1

</llo_original>
